<compile_context>
chip_gen: v7x
topology: tpu7x:2x2x1
jax: 0.10.0
libtpu: 0.0.40
codegen_flags: <defaults>
</compile_context>

<pallas_src>
import math
from functools import partial

import jax
import jax.numpy as jnp
from jax.experimental import pallas as pl
from jax.experimental.pallas import tpu as pltpu

_SQRT_2_OVER_PI = math.sqrt(2.0 / math.pi)
_COEF = 0.044715


def _gelu_kernel(x_ref, o_ref):
    x = x_ref[...]
    if x.dtype == jnp.bfloat16:
        # bf16 VPU/EUP math (v6e/v7x) keeps the kernel HBM-bound; on v5e the
        # compiler inserts the necessary upcasts.
        xc = x
    else:
        xc = x.astype(jnp.float32)
    dt = xc.dtype
    c = jnp.asarray(_SQRT_2_OVER_PI, dt)
    c2 = jnp.asarray(_SQRT_2_OVER_PI * _COEF, dt)  # precomputed c*0.044715
    # Factored polynomial: x*(c + c2*x*x) == c*(x + 0.044715*x^3), one fewer mul.
    inner = xc * (c + c2 * (xc * xc))
    y = jnp.asarray(0.5, dt) * xc * (jnp.asarray(1.0, dt) + jnp.tanh(inner))
    o_ref[...] = y.astype(o_ref.dtype)


def _gelu_formula(x):
    # Plain-XLA reference / tail path (f32 math).
    xf = x.astype(jnp.float32)
    c = _SQRT_2_OVER_PI
    y = 0.5 * xf * (1.0 + jnp.tanh(c * (xf + _COEF * xf * xf * xf)))
    return y.astype(x.dtype)


def _gelu_2d(x2d, block_rows):
    n_rows, n_cols = x2d.shape
    grid = (pl.cdiv(n_rows, block_rows),)
    return pl.pallas_call(
        _gelu_kernel,
        out_shape=jax.ShapeDtypeStruct((n_rows, n_cols), x2d.dtype),
        grid_spec=pltpu.PrefetchScalarGridSpec(
            num_scalar_prefetch=0,
            grid=grid,
            in_specs=[pl.BlockSpec((block_rows, n_cols), lambda i: (i, 0))],
            out_specs=pl.BlockSpec((block_rows, n_cols), lambda i: (i, 0)),
        ),
        compiler_params=pltpu.CompilerParams(
            dimension_semantics=("parallel",),
            # Explicit limit so 4 MiB tiles (4x double-buffered = 16 MiB) are
            # safe on v5e's 16 MiB default; well under physical VMEM everywhere.
            vmem_limit_bytes=32 * 1024 * 1024,
        ),
    )(x2d)


def _gelu_pallas_impl(x, *, target_tile_bytes=4 * 1024 * 1024):
    orig_shape = x.shape
    dtype = x.dtype
    total = x.size
    if total == 0:
        return x
    itemsize = jnp.dtype(dtype).itemsize
    # Sublane multiple per dtype: 8 (f32), 16 (bf16), 32 (int8/fp8).
    sublane = max(8, 32 // itemsize)

    # --- lane-dense column width: largest of {2048..128} dividing the count --
    n_cols = None
    for c in (2048, 1024, 512, 256, 128):
        if total % c == 0:
            n_cols = c
            break

    x_flat = jnp.ravel(x)  # contiguous ravel: free under jit

    if n_cols is None:
        # Unaligned element count: kernel handles the 128-aligned bulk, the
        # <128-element tail goes through plain XLA (no full-array pad/slice).
        n_cols = 128
        bulk = (total // n_cols) * n_cols
        tail = _gelu_formula(x_flat[bulk:])
        if bulk == 0:
            return tail.reshape(orig_shape)
        x_bulk = x_flat[:bulk]
        total_k = bulk
    else:
        x_bulk = x_flat
        tail = None
        total_k = total

    n_rows = total_k // n_cols
    x2d = x_bulk.reshape(n_rows, n_cols)

    # --- rows per tile: ~target_tile_bytes, rounded to the sublane multiple --
    target_rows = max(
        sublane, (target_tile_bytes // (n_cols * itemsize)) // sublane * sublane
    )
    if n_rows > target_rows:
        block_rows = target_rows  # ragged last block handled by Pallas masking
    elif n_rows >= 2 * sublane:
        # Split into >=2 blocks so the "parallel" axis can shard across v7x's
        # two TensorCores (no effect on single-TC v5e/v6e).
        block_rows = ((pl.cdiv(n_rows, 2) + sublane - 1) // sublane) * sublane
    else:
        block_rows = n_rows  # single full-array block (allowed even if < 8 rows)

    out2d = _gelu_2d(x2d, block_rows)

    out_flat = out2d.reshape(-1)
    if tail is not None:
        out_flat = jnp.concatenate([out_flat, tail])
    return out_flat.reshape(orig_shape)


# Jit the wrapper so ravel/reshape/slice/concat around the kernel don't add
# extra HBM passes in eager use.  All tiling decisions are static (shape/dtype).
gelu_pallas = jax.jit(partial(_gelu_pallas_impl))


if __name__ == "__main__":
    key = jax.random.PRNGKey(0)

    # Small shape consistent with typical usage: (batch=2, seq=8, hidden=32).
    x_small = jax.random.normal(key, (2, 8, 32), dtype=jnp.float32)
    y_small = jax.block_until_ready(gelu_pallas(x_small))
    assert y_small.shape == x_small.shape and y_small.dtype == x_small.dtype
    assert jnp.allclose(y_small, _gelu_formula(x_small), atol=1e-5, rtol=1e-5)

    # Larger shape exercising the multi-block / dual-TC tiling path.
    key2 = jax.random.PRNGKey(1)
    x_big = jax.random.normal(key2, (4, 128, 768), dtype=jnp.float32)
    y_big = jax.block_until_ready(gelu_pallas(x_big))
    assert y_big.shape == x_big.shape and y_big.dtype == x_big.dtype
    assert jnp.allclose(y_big, _gelu_formula(x_big), atol=1e-5, rtol=1e-5)

    # bf16 path (bf16 VPU/EUP math on v6e/v7x; slightly looser tolerance).
    x_bf16 = jax.random.normal(jax.random.PRNGKey(2), (2, 8, 256), dtype=jnp.bfloat16)
    y_bf16 = jax.block_until_ready(gelu_pallas(x_bf16))
    assert y_bf16.shape == x_bf16.shape and y_bf16.dtype == jnp.bfloat16
    assert jnp.allclose(
        y_bf16.astype(jnp.float32),
        _gelu_formula(x_bf16).astype(jnp.float32),
        atol=3e-2, rtol=3e-2,
    )

    # Unaligned element count: kernel bulk + XLA tail path.
    x_odd = jax.random.normal(jax.random.PRNGKey(3), (2, 10, 13), dtype=jnp.float32)
    y_odd = jax.block_until_ready(gelu_pallas(x_odd))
    assert y_odd.shape == x_odd.shape
    assert jnp.allclose(y_odd, _gelu_formula(x_odd), atol=1e-5, rtol=1e-5)

    print("KERNEL_OK")
</pallas_src>

<mosaic_0001>
module attributes {stable_mosaic.version = 11 : i64} {
  func.func @_gelu_kernel(%arg0: i32, %arg1: memref<1x512xf32, #tpu.memory_space<vmem>>, %arg2: memref<1x512xf32, #tpu.memory_space<vmem>>) attributes {dimension_semantics = [#tpu.dimension_semantics<parallel>], iteration_bounds = array<i64: 1>, scalar_prefetch = 0 : i64, scratch_operands = 0 : i64, tpu.core_type = #tpu.core_type<tc>, window_params = [{transform_indices = @transform_0, window_bounds = array<i64: 1, 512>}, {transform_indices = @transform_1, window_bounds = array<i64: 1, 512>}]} {
    %c0 = arith.constant 0 : index
    %c0_0 = arith.constant 0 : index
    %0 = vector.load %arg1[%c0, %c0_0] : memref<1x512xf32, #tpu.memory_space<vmem>>, vector<1x512xf32>
    %1 = arith.mulf %0, %0 : vector<1x512xf32>
    %cst = arith.constant 0.0356774069 : f32
    %2 = vector.broadcast %cst : f32 to vector<1x512xf32>
    %3 = arith.mulf %2, %1 : vector<1x512xf32>
    %cst_1 = arith.constant 0.797884583 : f32
    %4 = vector.broadcast %cst_1 : f32 to vector<1x512xf32>
    %5 = arith.addf %4, %3 : vector<1x512xf32>
    %6 = arith.mulf %0, %5 : vector<1x512xf32>
    %cst_2 = arith.constant 5.000000e-01 : f32
    %7 = vector.broadcast %cst_2 : f32 to vector<1x512xf32>
    %8 = arith.mulf %7, %0 : vector<1x512xf32>
    %9 = math.tanh %6 : vector<1x512xf32>
    %cst_3 = arith.constant 1.000000e+00 : f32
    %10 = vector.broadcast %cst_3 : f32 to vector<1x512xf32>
    %11 = arith.addf %10, %9 : vector<1x512xf32>
    %12 = arith.mulf %8, %11 : vector<1x512xf32>
    %c0_4 = arith.constant 0 : index
    %c0_5 = arith.constant 0 : index
    %13 = vector.load %arg2[%c0_4, %c0_5] : memref<1x512xf32, #tpu.memory_space<vmem>>, vector<1x512xf32>
    tpu.vector_store %arg2[%c0_4, %c0_5], %12 {strides = array<i32>} : memref<1x512xf32, #tpu.memory_space<vmem>>, vector<1x512xf32>,
    return
  }
  func.func @transform_0(%arg0: i32) -> (i32, i32) {
    %c0_i32 = arith.constant 0 : i32
    %c0_i32_0 = arith.constant 0 : i32
    return %arg0, %c0_i32 : i32, i32
  }
  func.func @transform_1(%arg0: i32) -> (i32, i32) {
    %c0_i32 = arith.constant 0 : i32
    %c0_i32_0 = arith.constant 0 : i32
    return %arg0, %c0_i32 : i32, i32
  }
}

</mosaic_0001>

<llo_original>
// kernel: _gelu_pallas_impl.1
$region0: #{_gelu_pallas_impl.1}
  #allocation0 [shape = 'u32[]', space=smem, size = 0x4, offset = 0x4, fixed_abs, tag = 'smem constant byte address 0x4 - core index']
  #allocation1 [shape = 'u32[144,128]{1,0:T(1,128)}', space=vmem, size = 0x12000, scoped, tag = 'internal scratch']
  %s0 = inlined_call_operand.vmem [shape: f32[1,512], index: 0, kind: input, shape index: {}]
  %s1 = inlined_call_operand.vmem [shape: f32[1,512], index: 1, kind: output, shape index: {}]
  %s2 = sld [smem:[#allocation0]]
  $region14: #{_gelu_pallas_impl.1} parent=0
    _
  %s4 = ssub.s32 1, %s2
  %s5 = scalar_select 0, %s4, %s2
  // Predicated region
  $region2: #{_gelu_pallas_impl.1} parent=0 // pred_check
    _
  $region3: #{_gelu_pallas_impl.1} parent=0 // pred_check_branch
    %7 = sbr.rel (0) target = $region5
  $region4: #{_gelu_pallas_impl.1} parent=0 // pred_region
    _
  $region5: #{_gelu_pallas_impl.1} parent=0 // pred_fallthru
    _
  %v8 = vld [vmem:[%s0] sm:$0xf]
  %v9 = vmul.f32 %v8, %v8
  %v10 = vmul.f32 %v9, 0.035677407
  %v11 = vadd.f32 %v10, 0.7978846
  %v12 = vmul.f32 %v8, %v11
  %v13 = vmul.f32 %v8, 0.5
  %v14 = vtanh.pop %v12
  %v15 = vadd.f32 %v14, 1.0
  %v16 = vmul.f32 %v13, %v15
  %v17 = vlaneseq
  %vm18 = vcmp.ge.s32.totalorder %v17, 0
  %vm19 = vcmp.lt.s32.totalorder %v17, 512
  %vm20 = vmand %vm18, %vm19
  %21 = vst.msk [vmem:[%s1] sm:$0xf] %vm20, %v16
  // Predicated region
  $region6: #{_gelu_pallas_impl.1} parent=0 // pred_check
    _
  $region7: #{_gelu_pallas_impl.1} parent=0 // pred_check_branch
    %23 = sbr.rel (0) target = $region9
  $region8: #{_gelu_pallas_impl.1} parent=0 // pred_region
    _
  $region9: #{_gelu_pallas_impl.1} parent=0 // pred_fallthru
    _
  // Predicated region
  $region10: #{_gelu_pallas_impl.1} parent=0 // pred_check
    _
  $region11: #{_gelu_pallas_impl.1} parent=0 // pred_check_branch
    %25 = sbr.rel (0) target = $region13
  $region12: #{_gelu_pallas_impl.1} parent=0 // pred_region
    _
  $region13: #{_gelu_pallas_impl.1} parent=0 // pred_fallthru
    _

</llo_original>
